<compile_context>
chip_gen: v6e
topology: v6e:2x2x1
jax: 0.10.0
libtpu: 0.0.40
codegen_flags: <defaults>
</compile_context>

<pallas_src>
import functools

import jax
import jax.numpy as jnp
from jax.experimental import pallas as pl
from jax.experimental.pallas import tpu as pltpu


def attention_layer_kernel(x_ref, w1_ref, b1_ref, w2_ref, out_ref, *, t_valid):
    # x_ref:  (BB, Tp, Hp) bf16    w1_ref: (Hp, Hp) bf16
    # b1_ref: (1, Hp) f32          w2_ref: (1, Hp) f32
    # out_ref: (BB, Hp) f32
    BB, Tp, Hp = x_ref.shape
    x3 = x_ref[...]                                           # (BB, Tp, Hp) bf16

    # ---- First linear (dominant cost): MXU, bf16 inputs, f32 accumulation ----
    h = jnp.dot(x3.reshape(BB * Tp, Hp), w1_ref[...],
                preferred_element_type=jnp.float32)           # (BB*Tp, Hp) f32
    h = jnp.tanh(h + b1_ref[...])                             # f32 tanh (EUP)

    # ---- Score projection on the VPU (lane reduce); keeps the MXU free ----
    scores = jnp.sum(h.reshape(BB, Tp, Hp) * w2_ref[...][None, :, :], axis=-1)
    # (b2 would be added here; constant pre-softmax shift => softmax no-op.)

    # Mask padded sequence positions out of the softmax (static branch).
    if t_valid < Tp:
        t_ids = jax.lax.broadcasted_iota(jnp.int32, (BB, Tp), 1)
        scores = jnp.where(t_ids < t_valid, scores, -jnp.inf)

    # ---- Softmax over T (lane axis) ----
    m = jnp.max(scores, axis=-1, keepdims=True)               # (BB, 1)
    e = jnp.exp(scores - m)                                   # (BB, Tp)
    denom = jnp.sum(e, axis=-1, keepdims=True)                # (BB, 1)
    attn = e * pl.reciprocal(denom, approx=True)              # (BB, Tp) f32

    # ---- Weighted sum over T on the VPU/XLU (sublane reduce); MXU stays on
    #      the first matmul. Products are f32 (bf16 x promoted). ----
    attended = jnp.sum(x3.astype(jnp.float32) * attn[:, :, None], axis=1)
    out_ref[...] = attended.astype(out_ref.dtype)             # (BB, Hp)


def _round_up(x, m):
    return ((x + m - 1) // m) * m


def attention_layer(hidden_states, w1, b1, w2, b2=None, *,
                    block_b=64, vmem_limit_bytes=None):
    """hidden_states: (B, T, H) f32; returns (B, H) f32.

    w1: (H, H) laid out so that y = x @ w1 + b1 (PyTorch weight transposed);
    b1: (H,) or (1, H); w2: (H, 1) or (H,); b2 accepted for API fidelity but
    unused (pre-softmax constant shift is a mathematical no-op).

    The wrapper pads B to a multiple of block_b, T to a multiple of 8 and H to
    a multiple of 128 (padded T positions are masked out of the softmax; padded
    H columns stay exactly zero), so production shapes should ideally already
    satisfy H % 128 == 0 and T % 8 == 0 to avoid the padding traffic.
    """
    B, T, H = hidden_states.shape
    Tp = max(_round_up(T, 8), 8)
    Hp = max(_round_up(H, 128), 128)

    # Explicit VMEM limit (~85% of physical); scoped defaults (16/32 MiB) would
    # otherwise force tiny tiles.
    if vmem_limit_bytes is None:
        try:
            vmem_cap = pltpu.get_tpu_info().vmem_capacity_bytes
        except Exception:
            vmem_cap = 64 * 1024 * 1024
        vmem_limit_bytes = int(vmem_cap * 0.85)

    # ---- block_b selection: multiple of 8, >=2 grid steps when batch allows
    #      (v7x: 2 TensorCores on the "parallel" axis), VMEM-budgeted. ----
    b8 = _round_up(B, 8)
    block_b = max(8, (min(block_b, b8) // 8) * 8)
    if b8 > 8 and b8 // block_b < 2:
        block_b = max(8, _round_up(pl.cdiv(b8, 2), 8))

    def _tile_bytes(bb):
        x_tile = bb * Tp * Hp * 2 * 2      # bf16 x, double-buffered
        h_tile = bb * Tp * Hp * 4 * 2      # f32 h + f32 product scratch
        out_tile = bb * Hp * 4 * 2         # f32 out, double-buffered
        return x_tile + h_tile + out_tile

    budget = int(vmem_limit_bytes * 0.6)   # rest: w1/b1/w2 + compiler scratch
    while block_b > 8 and _tile_bytes(block_b) > budget:
        block_b = max(8, ((block_b // 2) // 8) * 8)

    B_pad = _round_up(B, block_b)

    # ---- Pad & cast operands (x streamed in bf16; weights bf16/f32 rows) ----
    x = hidden_states.astype(jnp.bfloat16)
    if (B_pad, Tp, Hp) != (B, T, H):
        x = jnp.pad(x, ((0, B_pad - B), (0, Tp - T), (0, Hp - H)))
    w1_p = jnp.pad(jnp.asarray(w1, jnp.bfloat16), ((0, Hp - H), (0, Hp - H)))
    b1_p = jnp.pad(jnp.asarray(b1, jnp.float32).reshape(1, H),
                   ((0, 0), (0, Hp - H)))
    w2_p = jnp.pad(jnp.asarray(w2, jnp.float32).reshape(1, H),
                   ((0, 0), (0, Hp - H)))

    def _build(weight_pipeline_mode):
        wkw = ({"pipeline_mode": weight_pipeline_mode}
               if weight_pipeline_mode is not None else {})
        return pl.pallas_call(
            functools.partial(attention_layer_kernel, t_valid=T),
            out_shape=jax.ShapeDtypeStruct((B_pad, Hp), jnp.float32),
            grid_spec=pltpu.PrefetchScalarGridSpec(
                num_scalar_prefetch=0,
                grid=(B_pad // block_b,),
                in_specs=[
                    pl.BlockSpec((block_b, Tp, Hp), lambda b: (b, 0, 0)),
                    # Grid-invariant weights: constant index_map, VMEM-resident.
                    pl.BlockSpec((Hp, Hp), lambda b: (0, 0), **wkw),
                    pl.BlockSpec((1, Hp), lambda b: (0, 0), **wkw),
                    pl.BlockSpec((1, Hp), lambda b: (0, 0), **wkw),
                ],
                out_specs=pl.BlockSpec((block_b, Hp), lambda b: (b, 0)),
            ),
            compiler_params=pltpu.CompilerParams(
                dimension_semantics=("parallel",),
                vmem_limit_bytes=vmem_limit_bytes,
            ),
        )

    try:
        # Single-buffer the grid-invariant weights (saves a full w1 of VMEM).
        out = _build(pl.Buffered(1))(x, w1_p, b1_p, w2_p)
    except Exception:
        # Fallback to default double-buffering if this Pallas build rejects
        # buffer_count=1.
        out = _build(None)(x, w1_p, b1_p, w2_p)

    return out[:B, :H]


def reference(hidden_states, w1, b1, w2, b2):
    # Pure-JAX reference matching the PyTorch forward exactly (f32 throughout).
    scores = jnp.tanh(hidden_states @ w1 + b1) @ w2 + b2       # (B, T, 1)
    attn = jax.nn.softmax(scores[..., 0], axis=-1)             # (B, T)
    return jnp.sum(hidden_states * attn[..., None], axis=1)    # (B, H)


if __name__ == "__main__":
    B, T, H = 2, 8, 32

    key = jax.random.PRNGKey(0)
    k_x, k_w1, k_b1, k_w2, k_b2 = jax.random.split(key, 5)

    hidden_states = jax.random.normal(k_x, (B, T, H), dtype=jnp.float32)

    # Deterministic parameter init (PyTorch nn.Linear-style uniform bounds).
    bound1 = 1.0 / (H ** 0.5)
    w1 = jax.random.uniform(k_w1, (H, H), jnp.float32, -bound1, bound1)
    b1 = jax.random.uniform(k_b1, (1, H), jnp.float32, -bound1, bound1)
    w2 = jax.random.uniform(k_w2, (H, 1), jnp.float32, -bound1, bound1)
    b2 = jax.random.uniform(k_b2, (1, 1), jnp.float32, -bound1, bound1)

    out = attention_layer(hidden_states, w1, b1, w2, b2)
    out = jax.block_until_ready(out)

    ref = reference(hidden_states, w1, b1, w2, b2)
    assert out.shape == (B, H)
    # Tolerance accounts for bf16 x / w1 on the MXU (f32 accumulation) and the
    # EUP approximate reciprocal in the softmax; remaining math is f32.
    assert jnp.allclose(out, ref, atol=5e-2, rtol=5e-2), (
        f"max abs err = {jnp.max(jnp.abs(out - ref))}"
    )

    print("KERNEL_OK")
</pallas_src>

<mosaic_0001>
module attributes {stable_mosaic.version = 11 : i64} {
  func.func @attention_layer_kernel(%arg0: i32, %arg1: memref<8x8x128xbf16, #tpu.memory_space<vmem>>, %arg2: memref<128x128xbf16, #tpu.memory_space<vmem>>, %arg3: memref<1x128xf32, #tpu.memory_space<vmem>>, %arg4: memref<1x128xf32, #tpu.memory_space<vmem>>, %arg5: memref<8x128xf32, #tpu.memory_space<vmem>>) attributes {dimension_semantics = [#tpu.dimension_semantics<parallel>], iteration_bounds = array<i64: 1>, scalar_prefetch = 0 : i64, scratch_operands = 0 : i64, tpu.core_type = #tpu.core_type<tc>, window_params = [{transform_indices = @transform_0, window_bounds = array<i64: 8, 8, 128>}, {pipeline_mode = #tpu.pipeline_mode<synchronous>, transform_indices = @transform_1, window_bounds = array<i64: 128, 128>}, {pipeline_mode = #tpu.pipeline_mode<synchronous>, transform_indices = @transform_2, window_bounds = array<i64: 1, 128>}, {pipeline_mode = #tpu.pipeline_mode<synchronous>, transform_indices = @transform_3, window_bounds = array<i64: 1, 128>}, {transform_indices = @transform_4, window_bounds = array<i64: 8, 128>}]} {
    %c0 = arith.constant 0 : index
    %c0_0 = arith.constant 0 : index
    %c0_1 = arith.constant 0 : index
    %0 = vector.load %arg1[%c0, %c0_0, %c0_1] : memref<8x8x128xbf16, #tpu.memory_space<vmem>>, vector<8x8x128xbf16>
    %1 = vector.shape_cast %0 : vector<8x8x128xbf16> to vector<64x128xbf16>
    %c0_2 = arith.constant 0 : index
    %c0_3 = arith.constant 0 : index
    %2 = vector.load %arg2[%c0_2, %c0_3] : memref<128x128xbf16, #tpu.memory_space<vmem>>, vector<128x128xbf16>
    %cst = arith.constant dense<0.000000e+00> : vector<64x128xf32>
    %3 = tpu.matmul %1, %2, %cst {dimension_numbers = #tpu.dot_dimension_numbers<[1], [0], [0], [1], [0, 0, 1, 1], [], []>} : vector<64x128xbf16>, vector<128x128xbf16>, vector<64x128xf32> -> vector<64x128xf32>
    %c0_4 = arith.constant 0 : index
    %c0_5 = arith.constant 0 : index
    %4 = vector.load %arg3[%c0_4, %c0_5] : memref<1x128xf32, #tpu.memory_space<vmem>>, vector<1x128xf32>
    %5 = vector.broadcast %4 : vector<1x128xf32> to vector<64x128xf32>
    %6 = arith.addf %3, %5 : vector<64x128xf32>
    %7 = math.tanh %6 : vector<64x128xf32>
    %8 = vector.shape_cast %7 : vector<64x128xf32> to vector<8x8x128xf32>
    %c0_6 = arith.constant 0 : index
    %c0_7 = arith.constant 0 : index
    %9 = vector.load %arg4[%c0_6, %c0_7] : memref<1x128xf32, #tpu.memory_space<vmem>>, vector<1x128xf32>
    %10 = vector.shape_cast %9 : vector<1x128xf32> to vector<1x1x128xf32>
    %11 = vector.broadcast %10 : vector<1x1x128xf32> to vector<8x8x128xf32>
    %12 = arith.mulf %8, %11 : vector<8x8x128xf32>
    %cst_8 = arith.constant dense<0.000000e+00> : vector<8x8xf32>
    %13 = vector.multi_reduction <add>, %12, %cst_8 [2] : vector<8x8x128xf32> to vector<8x8xf32>
    %cst_9 = arith.constant dense<0xFF800000> : vector<8xf32>
    %14 = vector.multi_reduction <maximumf>, %13, %cst_9 [1] : vector<8x8xf32> to vector<8xf32>
    %15 = vector.shape_cast %14 : vector<8xf32> to vector<8x1xf32>
    %16 = vector.broadcast %15 : vector<8x1xf32> to vector<8x8xf32>
    %17 = arith.subf %13, %16 : vector<8x8xf32>
    %18 = math.exp %17 : vector<8x8xf32>
    %cst_10 = arith.constant dense<0.000000e+00> : vector<8xf32>
    %19 = vector.multi_reduction <add>, %18, %cst_10 [1] : vector<8x8xf32> to vector<8xf32>
    %20 = vector.shape_cast %19 : vector<8xf32> to vector<8x1xf32>
    %21 = tpu.reciprocal %20 {approx = true} : vector<8x1xf32> -> vector<8x1xf32>
    %22 = vector.broadcast %21 : vector<8x1xf32> to vector<8x8xf32>
    %23 = arith.mulf %18, %22 : vector<8x8xf32>
    %24 = arith.extf %0 : vector<8x8x128xbf16> to vector<8x8x128xf32>
    %25 = vector.shape_cast %23 : vector<8x8xf32> to vector<8x8x1xf32>
    %26 = vector.broadcast %25 : vector<8x8x1xf32> to vector<8x8x128xf32>
    %27 = arith.mulf %24, %26 : vector<8x8x128xf32>
    %cst_11 = arith.constant dense<0.000000e+00> : vector<8x128xf32>
    %28 = vector.multi_reduction <add>, %27, %cst_11 [1] : vector<8x8x128xf32> to vector<8x128xf32>
    %c0_12 = arith.constant 0 : index
    %c0_13 = arith.constant 0 : index
    %29 = vector.load %arg5[%c0_12, %c0_13] : memref<8x128xf32, #tpu.memory_space<vmem>>, vector<8x128xf32>
    tpu.vector_store %arg5[%c0_12, %c0_13], %28 {strides = array<i32>} : memref<8x128xf32, #tpu.memory_space<vmem>>, vector<8x128xf32>,
    return
  }
  func.func @transform_0(%arg0: i32) -> (i32, i32, i32) {
    %c0_i32 = arith.constant 0 : i32
    %c0_i32_0 = arith.constant 0 : i32
    %c0_i32_1 = arith.constant 0 : i32
    return %arg0, %c0_i32, %c0_i32_0 : i32, i32, i32
  }
  func.func @transform_1(%arg0: i32) -> (i32, i32) {
    %c0_i32 = arith.constant 0 : i32
    %c0_i32_0 = arith.constant 0 : i32
    %c0_i32_1 = arith.constant 0 : i32
    return %c0_i32, %c0_i32_0 : i32, i32
  }
  func.func @transform_2(%arg0: i32) -> (i32, i32) {
    %c0_i32 = arith.constant 0 : i32
    %c0_i32_0 = arith.constant 0 : i32
    %c0_i32_1 = arith.constant 0 : i32
    return %c0_i32, %c0_i32_0 : i32, i32
  }
  func.func @transform_3(%arg0: i32) -> (i32, i32) {
    %c0_i32 = arith.constant 0 : i32
    %c0_i32_0 = arith.constant 0 : i32
    %c0_i32_1 = arith.constant 0 : i32
    return %c0_i32, %c0_i32_0 : i32, i32
  }
  func.func @transform_4(%arg0: i32) -> (i32, i32) {
    %c0_i32 = arith.constant 0 : i32
    %c0_i32_0 = arith.constant 0 : i32
    return %arg0, %c0_i32 : i32, i32
  }
}

module attributes {stable_mosaic.version = 11 : i64} {
  func.func @attention_layer_kernel(%arg0: i32, %arg1: memref<8x8x128xbf16, #tpu.memory_space<vmem>>, %arg2: memref<128x128xbf16, #tpu.memory_space<vmem>>, %arg3: memref<1x128xf32, #tpu.memory_space<vmem>>, %arg4: memref<1x128xf32, #tpu.memory_space<vmem>>, %arg5: memref<8x128xf32, #tpu.memory_space<vmem>>) attributes {dimension_semantics = [#tpu.dimension_semantics<parallel>], iteration_bounds = array<i64: 1>, scalar_prefetch = 0 : i64, scratch_operands = 0 : i64, tpu.core_type = #tpu.core_type<tc>, window_params = [{transform_indices = @transform_0, window_bounds = array<i64: 8, 8, 128>}, {pipeline_mode = #tpu.pipeline_mode<synchronous>, transform_indices = @transform_1, window_bounds = array<i64: 128, 128>}, {pipeline_mode = #tpu.pipeline_mode<synchronous>, transform_indices = @transform_2, window_bounds = array<i64: 1, 128>}, {pipeline_mode = #tpu.pipeline_mode<synchronous>, transform_indices = @transform_3, window_bounds = array<i64: 1, 128>}, {transform_indices = @transform_4, window_bounds = array<i64: 8, 128>}]} {
    %c0 = arith.constant 0 : index
    %c0_0 = arith.constant 0 : index
    %c0_1 = arith.constant 0 : index
    %0 = vector.load %arg1[%c0, %c0_0, %c0_1] : memref<8x8x128xbf16, #tpu.memory_space<vmem>>, vector<8x8x128xbf16>
    %1 = vector.shape_cast %0 : vector<8x8x128xbf16> to vector<64x128xbf16>
    %c0_2 = arith.constant 0 : index
    %c0_3 = arith.constant 0 : index
    %2 = vector.load %arg2[%c0_2, %c0_3] : memref<128x128xbf16, #tpu.memory_space<vmem>>, vector<128x128xbf16>
    %cst = arith.constant dense<0.000000e+00> : vector<64x128xf32>
    %3 = tpu.matmul %1, %2, %cst {dimension_numbers = #tpu.dot_dimension_numbers<[1], [0], [0], [1], [0, 0, 1, 1], [], []>} : vector<64x128xbf16>, vector<128x128xbf16>, vector<64x128xf32> -> vector<64x128xf32>
    %c0_4 = arith.constant 0 : index
    %c0_5 = arith.constant 0 : index
    %4 = vector.load %arg3[%c0_4, %c0_5] : memref<1x128xf32, #tpu.memory_space<vmem>>, vector<1x128xf32>
    %5 = vector.broadcast %4 : vector<1x128xf32> to vector<64x128xf32>
    %6 = arith.addf %3, %5 : vector<64x128xf32>
    %7 = math.tanh %6 : vector<64x128xf32>
    %8 = vector.shape_cast %7 : vector<64x128xf32> to vector<8x8x128xf32>
    %c0_6 = arith.constant 0 : index
    %c0_7 = arith.constant 0 : index
    %9 = vector.load %arg4[%c0_6, %c0_7] : memref<1x128xf32, #tpu.memory_space<vmem>>, vector<1x128xf32>
    %10 = vector.shape_cast %9 : vector<1x128xf32> to vector<1x1x128xf32>
    %11 = vector.broadcast %10 : vector<1x1x128xf32> to vector<8x8x128xf32>
    %12 = arith.mulf %8, %11 : vector<8x8x128xf32>
    %cst_8 = arith.constant dense<0.000000e+00> : vector<8x8xf32>
    %13 = vector.multi_reduction <add>, %12, %cst_8 [2] : vector<8x8x128xf32> to vector<8x8xf32>
    %cst_9 = arith.constant dense<0xFF800000> : vector<8xf32>
    %14 = vector.multi_reduction <maximumf>, %13, %cst_9 [1] : vector<8x8xf32> to vector<8xf32>
    %15 = vector.shape_cast %14 : vector<8xf32> to vector<8x1xf32>
    %16 = vector.broadcast %15 : vector<8x1xf32> to vector<8x8xf32>
    %17 = arith.subf %13, %16 : vector<8x8xf32>
    %18 = math.exp %17 : vector<8x8xf32>
    %cst_10 = arith.constant dense<0.000000e+00> : vector<8xf32>
    %19 = vector.multi_reduction <add>, %18, %cst_10 [1] : vector<8x8xf32> to vector<8xf32>
    %20 = vector.shape_cast %19 : vector<8xf32> to vector<8x1xf32>
    %21 = tpu.reciprocal %20 {approx = true} : vector<8x1xf32> -> vector<8x1xf32>
    %22 = vector.broadcast %21 : vector<8x1xf32> to vector<8x8xf32>
    %23 = arith.mulf %18, %22 : vector<8x8xf32>
    %24 = arith.extf %0 : vector<8x8x128xbf16> to vector<8x8x128xf32>
    %25 = vector.shape_cast %23 : vector<8x8xf32> to vector<8x8x1xf32>
    %26 = vector.broadcast %25 : vector<8x8x1xf32> to vector<8x8x128xf32>
    %27 = arith.mulf %24, %26 : vector<8x8x128xf32>
    %cst_11 = arith.constant dense<0.000000e+00> : vector<8x128xf32>
    %28 = vector.multi_reduction <add>, %27, %cst_11 [1] : vector<8x8x128xf32> to vector<8x128xf32>
    %c0_12 = arith.constant 0 : index
    %c0_13 = arith.constant 0 : index
    %29 = vector.load %arg5[%c0_12, %c0_13] : memref<8x128xf32, #tpu.memory_space<vmem>>, vector<8x128xf32>
    tpu.vector_store %arg5[%c0_12, %c0_13], %28 {strides = array<i32>} : memref<8x128xf32, #tpu.memory_space<vmem>>, vector<8x128xf32>,
    return
  }
  func.func @transform_0(%arg0: i32) -> (i32, i32, i32) {
    %c0_i32 = arith.constant 0 : i32
    %c0_i32_0 = arith.constant 0 : i32
    %c0_i32_1 = arith.constant 0 : i32
    return %arg0, %c0_i32, %c0_i32_0 : i32, i32, i32
  }
  func.func @transform_1(%arg0: i32) -> (i32, i32) {
    %c0_i32 = arith.constant 0 : i32
    %c0_i32_0 = arith.constant 0 : i32
    %c0_i32_1 = arith.constant 0 : i32
    return %c0_i32, %c0_i32_0 : i32, i32
  }
  func.func @transform_2(%arg0: i32) -> (i32, i32) {
    %c0_i32 = arith.constant 0 : i32
    %c0_i32_0 = arith.constant 0 : i32
    %c0_i32_1 = arith.constant 0 : i32
    return %c0_i32, %c0_i32_0 : i32, i32
  }
  func.func @transform_3(%arg0: i32) -> (i32, i32) {
    %c0_i32 = arith.constant 0 : i32
    %c0_i32_0 = arith.constant 0 : i32
    %c0_i32_1 = arith.constant 0 : i32
    return %c0_i32, %c0_i32_0 : i32, i32
  }
  func.func @transform_4(%arg0: i32) -> (i32, i32) {
    %c0_i32 = arith.constant 0 : i32
    %c0_i32_0 = arith.constant 0 : i32
    return %arg0, %c0_i32 : i32, i32
  }
}

</mosaic_0001>

<llo_original>
// kernel: tpu_custom_call.1
$region0: #{tpu_custom_call.1}
  #allocation0 [shape = 'u32[]', space=smem, size = 0x4, offset = 0x4, fixed_abs, tag = 'smem constant byte address 0x4 - core index']
  #allocation1 [shape = 'u32[144,128]{1,0:T(1,128)}', space=vmem, size = 0x12000, scoped, tag = 'internal scratch']
  %s0 = inlined_call_operand.hbm [shape: bf16[8,8,128], index: 0, kind: input, shape index: {}]
  %s1 = inlined_call_operand.hbm [shape: bf16[128,128], index: 1, kind: input, shape index: {}]
  %s2 = inlined_call_operand.vmem [shape: f32[1,128], index: 2, kind: input, shape index: {}]
  %s3 = inlined_call_operand.vmem [shape: f32[1,128], index: 3, kind: input, shape index: {}]
  %s4 = inlined_call_operand.hbm [shape: f32[8,128], index: 4, kind: output, shape index: {}]
  %s5 = sld [smem:[#allocation0]]
  $region34: #{tpu_custom_call.1} parent=0
    _
  %s7 = ssub.s32 1, %s5
  %s8 = scalar_select 0, %s7, %s5
  $region1: #{tpu_custom_call.1} parent=0
    #allocation2 [shape = 'u8[16384]{0}', space=vmem, size = 0x4000, scoped, tag = 'input window, operand 0, single buffered']
    #allocation3 [shape = 's32[1]{0}', space=sflag, size = 0x4, scoped, tag = 'scoped memory for tpu_custom_call.1']
    #allocation4 [shape = 's32[1]{0}', space=sflag, size = 0x4, scoped, tag = 'scoped memory for tpu_custom_call.1']
    #allocation5 [shape = 'u8[32768]{0}', space=vmem, size = 0x8000, scoped, tag = 'input window, operand 1, single buffered']
    #allocation6 [shape = 's32[1]{0}', space=sflag, size = 0x4, scoped, tag = 'scoped memory for tpu_custom_call.1']
    #allocation7 [shape = 'u8[4096]{0}', space=vmem, size = 0x1000, scoped, tag = 'output window, operand 0, single buffered']
    %9 = vsyncpa [#allocation3], 0
    %10 = vsyncpa [#allocation6], 0
    %11 = vsyncpa [#allocation4], 0
    // Predicated region
    $region2: #{tpu_custom_call.1} parent=1 // pred_check
      _
    $region3: #{tpu_custom_call.1} parent=1 // pred_check_branch
      %13 = sbr.rel (0) target = $region5
    $region4: #{tpu_custom_call.1} parent=1 // pred_region
      %s15 = ssub.s32 512, 512
      %16 = vsyncadd [#allocation3], %s15
      %s17 = sshll.u32 [#allocation2], 4
      %s18 = int_to_ptr.vmem [resolvable:$true] %s17
      %23 = dma.hbm_to_vmem [thread:$0]  %s0, 512, %s18, [#allocation3], 64, 64, 4
    $region5: #{tpu_custom_call.1} parent=1 // pred_fallthru
      _
    // Predicated region
    $region6: #{tpu_custom_call.1} parent=1 // pred_check
      _
    $region7: #{tpu_custom_call.1} parent=1 // pred_check_branch
      %25 = sbr.rel (0) target = $region9
    $region8: #{tpu_custom_call.1} parent=1 // pred_region
      %s27 = ssub.s32 1024, 1024
      %28 = vsyncadd [#allocation6], %s27
      %s29 = sshll.u32 [#allocation5], 4
      %s30 = int_to_ptr.vmem [resolvable:$true] %s29
      %35 = dma.hbm_to_vmem [thread:$0]  %s1, 1024, %s30, [#allocation6], 64, 64, 4
    $region9: #{tpu_custom_call.1} parent=1 // pred_fallthru
      _
    // Predicated region
    $region10: #{tpu_custom_call.1} parent=1 // pred_check
      _
    $region11: #{tpu_custom_call.1} parent=1 // pred_check_branch
      %37 = sbr.rel (0) target = $region13
    $region12: #{tpu_custom_call.1} parent=1 // pred_region
      _
    $region13: #{tpu_custom_call.1} parent=1 // pred_fallthru
      _
    // Predicated region
    $region14: #{tpu_custom_call.1} parent=1 // pred_check
      _
    $region15: #{tpu_custom_call.1} parent=1 // pred_check_branch
      %39 = sbr.rel (0) target = $region17
    $region16: #{tpu_custom_call.1} parent=1 // pred_region
      _
    $region17: #{tpu_custom_call.1} parent=1 // pred_fallthru
      _
    // Predicated region
    $region18: #{tpu_custom_call.1} parent=1 // pred_check
      _
    $region19: #{tpu_custom_call.1} parent=1 // pred_check_branch
      %41 = sbr.rel (0) target = $region21
    $region20: #{tpu_custom_call.1} parent=1 // pred_region
      %42 = dma.done [#allocation3], 512
    $region21: #{tpu_custom_call.1} parent=1 // pred_fallthru
      _
    // Predicated region
    $region22: #{tpu_custom_call.1} parent=1 // pred_check
      _
    $region23: #{tpu_custom_call.1} parent=1 // pred_check_branch
      %44 = sbr.rel (0) target = $region25
    $region24: #{tpu_custom_call.1} parent=1 // pred_region
      %45 = dma.done [#allocation6], 1024
    $region25: #{tpu_custom_call.1} parent=1 // pred_fallthru
      _
    %v47 = vld [vmem:[#allocation2] sm:$0xf]
    %v48 = vld [vmem:[#allocation2 + $0x4] sm:$0xf]
    %v49 = vld [vmem:[#allocation2 + $0x8] sm:$0xf]
    %v50 = vld [vmem:[#allocation2 + $0xc] sm:$0xf]
    %v51 = vld [vmem:[#allocation2 + $0x10] sm:$0xf]
    %v52 = vld [vmem:[#allocation2 + $0x14] sm:$0xf]
    %v53 = vld [vmem:[#allocation2 + $0x18] sm:$0xf]
    %v54 = vld [vmem:[#allocation2 + $0x1c] sm:$0xf]
    %v55 = vld [vmem:[#allocation5] sm:$0xf]
    %v56 = vld [vmem:[#allocation5 + $0x4] sm:$0xf]
    %v57 = vld [vmem:[#allocation5 + $0x8] sm:$0xf]
    %v58 = vld [vmem:[#allocation5 + $0xc] sm:$0xf]
    %v59 = vld [vmem:[#allocation5 + $0x10] sm:$0xf]
    %v60 = vld [vmem:[#allocation5 + $0x14] sm:$0xf]
    %v61 = vld [vmem:[#allocation5 + $0x18] sm:$0xf]
    %v62 = vld [vmem:[#allocation5 + $0x1c] sm:$0xf]
    %v63 = vld [vmem:[#allocation5 + $0x20] sm:$0xf]
    %v64 = vld [vmem:[#allocation5 + $0x24] sm:$0xf]
    %v65 = vld [vmem:[#allocation5 + $0x28] sm:$0xf]
    %v66 = vld [vmem:[#allocation5 + $0x2c] sm:$0xf]
    %v67 = vld [vmem:[#allocation5 + $0x30] sm:$0xf]
    %v68 = vld [vmem:[#allocation5 + $0x34] sm:$0xf]
    %v69 = vld [vmem:[#allocation5 + $0x38] sm:$0xf]
    %v70 = vld [vmem:[#allocation5 + $0x3c] sm:$0xf]
    %v71 = vld [vmem:[%s2] sm:$0x1]
    %v73 = vlaneseq
    %v74 = vshrl.u32 %v73, 7
    %v75 = vsub.s32 0, %v74
    %v76 = vrot.slane %v71, %v75
    %v86 = vunpack.c.l.b16 %v47
    %v87 = vunpack.c.l.b16 %v48
    %v88 = vunpack.c.l.b16 %v49
    %v89 = vunpack.c.l.b16 %v50
    %v90 = vunpack.c.l.b16 %v51
    %v91 = vunpack.c.l.b16 %v52
    %v92 = vunpack.c.l.b16 %v53
    %v93 = vunpack.c.l.b16 %v54
    %v94 = vpack.c.b16 %v87, %v86
    %v95 = vpack.c.b16 %v89, %v88
    %v96 = vpack.c.b16 %v91, %v90
    %v97 = vpack.c.b16 %v93, %v92
    %v118 = vunpack.c.l.b16 %v55
    %v119 = vunpack.c.l.b16 %v56
    %v120 = vunpack.c.l.b16 %v57
    %v121 = vunpack.c.l.b16 %v58
    %v122 = vunpack.c.l.b16 %v59
    %v123 = vunpack.c.l.b16 %v60
    %v124 = vunpack.c.l.b16 %v61
    %v125 = vunpack.c.l.b16 %v62
    %v126 = vunpack.c.l.b16 %v63
    %v127 = vunpack.c.l.b16 %v64
    %v128 = vunpack.c.l.b16 %v65
    %v129 = vunpack.c.l.b16 %v66
    %v130 = vunpack.c.l.b16 %v67
    %v131 = vunpack.c.l.b16 %v68
    %v132 = vunpack.c.l.b16 %v69
    %v133 = vunpack.c.l.b16 %v70
    %v134 = vpack.c.b16 %v119, %v118
    %v135 = vpack.c.b16 %v121, %v120
    %v136 = vpack.c.b16 %v123, %v122
    %v137 = vpack.c.b16 %v125, %v124
    %v138 = vpack.c.b16 %v127, %v126
    %v139 = vpack.c.b16 %v129, %v128
    %v140 = vpack.c.b16 %v131, %v130
    %v141 = vpack.c.b16 %v133, %v132
    %150 = vmatprep.subr.bf16.mxu0 0
    %151 = vmatpush1.bf16.msra.mxu0 %v141
    %152 = vmatprep.subr.bf16.mxu0 0
    %153 = vmatpush1.bf16.msra.mxu0 %v140
    %154 = vmatprep.subr.bf16.mxu0 0
    %155 = vmatpush1.bf16.msra.mxu0 %v139
    %156 = vmatprep.subr.bf16.mxu0 0
    %157 = vmatpush1.bf16.msra.mxu0 %v138
    %158 = vmatprep.subr.bf16.mxu0 0
    %159 = vmatpush1.bf16.msra.mxu0 %v137
    %160 = vmatprep.subr.bf16.mxu0 0
    %161 = vmatpush1.bf16.msra.mxu0 %v136
    %162 = vmatprep.subr.bf16.mxu0 0
    %163 = vmatpush1.bf16.msra.mxu0 %v135
    %164 = vmatprep.subr.bf16.mxu0 0
    %165 = vmatpush1.bf16.msra.mxu0 %v134
    %166 = vmatprep.subr.bf16.mxu0 0
    %167 = vmatpush2.bf16.msra.mxu0 0
    %168 = vmatprep.subr.bf16.mxu0 0
    %169 = vmatpush2.bf16.msra.mxu0 0
    %170 = vmatprep.subr.bf16.mxu0 0
    %171 = vmatpush2.bf16.msra.mxu0 0
    %172 = vmatprep.subr.bf16.mxu0 0
    %173 = vmatpush2.bf16.msra.mxu0 0
    %174 = vmatprep.subr.bf16.mxu0 0
    %175 = vmatpush2.bf16.msra.mxu0 0
    %176 = vmatprep.subr.bf16.mxu0 0
    %177 = vmatpush2.bf16.msra.mxu0 0
    %178 = vmatprep.subr.bf16.mxu0 0
    %179 = vmatpush2.bf16.msra.mxu0 0
    %180 = vmatprep.subr.bf16.mxu0 0
    %181 = vmatpush2.bf16.msra.mxu0 0
    %182 = vmatprep.mubr.bf16.mxu0 0
    %183 = vmatmul.mubr.bf16.gmra.mxu0 %v94
    %v184 = vpop.f32.mrf.mxu0
    %v185 = vadd.f32 %v76, %v184
    %v186 = vpop.f32.mrf.mxu0
    %v187 = vpop.f32.mrf.mxu0
    %v188 = vadd.f32 %v76, %v187
    %v189 = vpop.f32.mrf.mxu0
    %190 = vmatprep.mubr.bf16.mxu0 0
    %191 = vmatmul.mubr.bf16.gmra.mxu0 %v95
    %v192 = vpop.f32.mrf.mxu0
    %v193 = vadd.f32 %v76, %v192
    %v194 = vpop.f32.mrf.mxu0
    %v195 = vpop.f32.mrf.mxu0
    %v196 = vadd.f32 %v76, %v195
    %v197 = vpop.f32.mrf.mxu0
    %198 = vmatprep.mubr.bf16.mxu0 0
    %199 = vmatmul.mubr.bf16.gmra.mxu0 %v96
    %v200 = vpop.f32.mrf.mxu0
    %v201 = vadd.f32 %v76, %v200
    %v202 = vpop.f32.mrf.mxu0
    %v203 = vpop.f32.mrf.mxu0
    %v204 = vadd.f32 %v76, %v203
    %v205 = vpop.f32.mrf.mxu0
    %206 = vmatprep.mubr.bf16.mxu0 0
    %207 = vmatmul.mubr.bf16.gmra.mxu0 %v97
    %v208 = vpop.f32.mrf.mxu0
    %v209 = vadd.f32 %v76, %v208
    %v210 = vpop.f32.mrf.mxu0
    %v211 = vpop.f32.mrf.mxu0
    %v212 = vadd.f32 %v76, %v211
    %v213 = vpop.f32.mrf.mxu0
    %214 = vdwg.mxu0
    %v215 = vtanh.pop %v185
    %v216 = vtanh.pop %v188
    %v217 = vtanh.pop %v193
    %v218 = vtanh.pop %v196
    %v219 = vtanh.pop %v201
    %v220 = vtanh.pop %v204
    %v221 = vtanh.pop %v209
    %v222 = vtanh.pop %v212
    %v223 = vld [vmem:[%s3] sm:$0x1]
    %v225 = vlaneseq
    %v226 = vshrl.u32 %v225, 7
    %v227 = vsub.s32 0, %v226
    %v228 = vrot.slane %v223, %v227
    %v230 = vmul.f32 %v215, %v228
    %v231 = vmul.f32 %v216, %v228
    %v232 = vmul.f32 %v217, %v228
    %v233 = vmul.f32 %v218, %v228
    %v234 = vmul.f32 %v219, %v228
    %v235 = vmul.f32 %v220, %v228
    %v236 = vmul.f32 %v221, %v228
    %v237 = vmul.f32 %v222, %v228
    %238 = vadd.xlane.f32.xlu0 %v230
    %v239 = vpop.xlane.xlu0 %238
    %240 = vadd.xlane.f32.xlu0 %v231
    %v241 = vpop.xlane.xlu0 %240
    %242 = vadd.xlane.f32.xlu0 %v232
    %v243 = vpop.xlane.xlu0 %242
    %244 = vadd.xlane.f32.xlu0 %v233
    %v245 = vpop.xlane.xlu0 %244
    %246 = vadd.xlane.f32.xlu0 %v234
    %v247 = vpop.xlane.xlu0 %246
    %248 = vadd.xlane.f32.xlu0 %v235
    %v249 = vpop.xlane.xlu0 %248
    %250 = vadd.xlane.f32.xlu0 %v236
    %v251 = vpop.xlane.xlu0 %250
    %252 = vadd.xlane.f32.xlu0 %v237
    %v253 = vpop.xlane.xlu0 %252
    %v262 = vlaneseq
    %v263 = vand.u32 %v262, 127
    %v264 = vlaneseq
    %v265 = vshrl.u32 %v264, 7
    %v266 = vsub.s32 %v263, %v265
    %v267 = vrot.slane %v239, %v266
    %v268 = vlaneseq
    %v269 = vshrl.u32 %v268, 7
    %v270 = vsub.s32 %v263, %v269
    %v271 = vrot.slane %v241, %v270
    %v272 = vlaneseq
    %v273 = vshrl.u32 %v272, 7
    %v274 = vsub.s32 %v263, %v273
    %v275 = vrot.slane %v243, %v274
    %v276 = vlaneseq
    %v277 = vshrl.u32 %v276, 7
    %v278 = vsub.s32 %v263, %v277
    %v279 = vrot.slane %v245, %v278
    %v280 = vlaneseq
    %v281 = vshrl.u32 %v280, 7
    %v282 = vsub.s32 %v263, %v281
    %v283 = vrot.slane %v247, %v282
    %v284 = vlaneseq
    %v285 = vshrl.u32 %v284, 7
    %v286 = vsub.s32 %v263, %v285
    %v287 = vrot.slane %v249, %v286
    %v288 = vlaneseq
    %v289 = vshrl.u32 %v288, 7
    %v290 = vsub.s32 %v263, %v289
    %v291 = vrot.slane %v251, %v290
    %v292 = vlaneseq
    %v293 = vshrl.u32 %v292, 7
    %v294 = vsub.s32 %v263, %v293
    %v295 = vrot.slane %v253, %v294
    %vm296 = vcmask 1041409
    %v297 = vsel %vm296, %v271, %v267
    %vm298 = vcmask 1042434
    %v299 = vsel %vm298, %v275, %v297
    %vm300 = vcmask 1043459
    %v301 = vsel %vm300, %v279, %v299
    %vm302 = vcmask 1044484
    %v303 = vsel %vm302, %v283, %v301
    %vm304 = vcmask 1045509
    %v305 = vsel %vm304, %v287, %v303
    %vm306 = vcmask 1046534
    %v307 = vsel %vm306, %v291, %v305
    %vm308 = vcmask 1047559
    %v309 = vsel %vm308, %v295, %v307
    %vm311 = vcmask 64512
    %v312 = vsel %vm311, %v309, -inf
    %313 = vmax.xlane.f32.xlu0 %v312
    %v314 = vpop.xlane.xlu0 %313
    %v316 = vlaneseq
    %v317 = vshrl.u32 %v316, 7
    %v318 = vsub.s32 0, %v317
    %v319 = vrot.slane %v314, %v318
    %v320 = vlaneseq
    %v321 = vshrl.u32 %v320, 7
    %v322 = vsub.s32 1, %v321
    %v323 = vrot.slane %v314, %v322
    %v324 = vlaneseq
    %v325 = vshrl.u32 %v324, 7
    %v326 = vsub.s32 2, %v325
    %v327 = vrot.slane %v314, %v326
    %v328 = vlaneseq
    %v329 = vshrl.u32 %v328, 7
    %v330 = vsub.s32 3, %v329
    %v331 = vrot.slane %v314, %v330
    %v332 = vlaneseq
    %v333 = vshrl.u32 %v332, 7
    %v334 = vsub.s32 4, %v333
    %v335 = vrot.slane %v314, %v334
    %v336 = vlaneseq
    %v337 = vshrl.u32 %v336, 7
    %v338 = vsub.s32 5, %v337
    %v339 = vrot.slane %v314, %v338
    %v340 = vlaneseq
    %v341 = vshrl.u32 %v340, 7
    %v342 = vsub.s32 6, %v341
    %v343 = vrot.slane %v314, %v342
    %v344 = vlaneseq
    %v345 = vshrl.u32 %v344, 7
    %v346 = vsub.s32 7, %v345
    %v347 = vrot.slane %v314, %v346
    %v356 = vsub.f32 %v239, %v319
    %v357 = vsub.f32 %v241, %v323
    %v358 = vsub.f32 %v243, %v327
    %v359 = vsub.f32 %v245, %v331
    %v360 = vsub.f32 %v247, %v335
    %v361 = vsub.f32 %v249, %v339
    %v362 = vsub.f32 %v251, %v343
    %v363 = vsub.f32 %v253, %v347
    %v364 = vmul.f32 %v356, 1.442695
    %v365 = vpow.pop %v364
    %v366 = vmul.f32 %v357, 1.442695
    %v367 = vpow.pop %v366
    %v368 = vmul.f32 %v358, 1.442695
    %v369 = vpow.pop %v368
    %v370 = vmul.f32 %v359, 1.442695
    %v371 = vpow.pop %v370
    %v372 = vmul.f32 %v360, 1.442695
    %v373 = vpow.pop %v372
    %v374 = vmul.f32 %v361, 1.442695
    %v375 = vpow.pop %v374
    %v376 = vmul.f32 %v362, 1.442695
    %v377 = vpow.pop %v376
    %v378 = vmul.f32 %v363, 1.442695
    %v379 = vpow.pop %v378
    %388 = vset.pattern.permute.xlu0 0
    %389 = vperm.xlu0 %388, %v365
    %v390 = vpop.permute.xlu0 %389
    %391 = vset.pattern.permute.xlu0 0
    %392 = vperm.xlu0 %391, %v367
    %v393 = vpop.permute.xlu0 %392
    %394 = vset.pattern.permute.xlu0 0
    %395 = vperm.xlu0 %394, %v369
    %v396 = vpop.permute.xlu0 %395
    %397 = vset.pattern.permute.xlu0 0
    %398 = vperm.xlu0 %397, %v371
    %v399 = vpop.permute.xlu0 %398
    %400 = vset.pattern.permute.xlu0 0
    %401 = vperm.xlu0 %400, %v373
    %v402 = vpop.permute.xlu0 %401
    %403 = vset.pattern.permute.xlu0 0
    %404 = vperm.xlu0 %403, %v375
    %v405 = vpop.permute.xlu0 %404
    %406 = vset.pattern.permute.xlu0 0
    %407 = vperm.xlu0 %406, %v377
    %v408 = vpop.permute.xlu0 %407
    %409 = vset.pattern.permute.xlu0 0
    %410 = vperm.xlu0 %409, %v379
    %v411 = vpop.permute.xlu0 %410
    %v412 = vlaneseq
    %v413 = vshrl.u32 %v412, 7
    %v414 = vsub.s32 %v263, %v413
    %v415 = vrot.slane %v390, %v414
    %v416 = vlaneseq
    %v417 = vshrl.u32 %v416, 7
    %v418 = vsub.s32 %v263, %v417
    %v419 = vrot.slane %v393, %v418
    %v420 = vlaneseq
    %v421 = vshrl.u32 %v420, 7
    %v422 = vsub.s32 %v263, %v421
    %v423 = vrot.slane %v396, %v422
    %v424 = vlaneseq
    %v425 = vshrl.u32 %v424, 7
    %v426 = vsub.s32 %v263, %v425
    %v427 = vrot.slane %v399, %v426
    %v428 = vlaneseq
    %v429 = vshrl.u32 %v428, 7
    %v430 = vsub.s32 %v263, %v429
    %v431 = vrot.slane %v402, %v430
    %v432 = vlaneseq
    %v433 = vshrl.u32 %v432, 7
    %v434 = vsub.s32 %v263, %v433
    %v435 = vrot.slane %v405, %v434
    %v436 = vlaneseq
    %v437 = vshrl.u32 %v436, 7
    %v438 = vsub.s32 %v263, %v437
    %v439 = vrot.slane %v408, %v438
    %v440 = vlaneseq
    %v441 = vshrl.u32 %v440, 7
    %v442 = vsub.s32 %v263, %v441
    %v443 = vrot.slane %v411, %v442
    %v444 = vsel %vm296, %v419, %v415
    %v445 = vsel %vm298, %v423, %v444
    %v446 = vsel %vm300, %v427, %v445
    %v447 = vsel %vm302, %v431, %v446
    %v448 = vsel %vm304, %v435, %v447
    %v449 = vsel %vm306, %v439, %v448
    %v450 = vsel %vm308, %v443, %v449
    %v452 = vsel %vm311, %v450, 0.0
    %453 = vadd.xlane.f32.xlu0 %v452
    %v454 = vpop.xlane.xlu0 %453
    %v455 = vrcp.pop %v454
    %v457 = vlaneseq
    %v458 = vshrl.u32 %v457, 7
    %v459 = vsub.s32 0, %v458
    %v460 = vrot.slane %v455, %v459
    %v461 = vlaneseq
    %v462 = vshrl.u32 %v461, 7
    %v463 = vsub.s32 1, %v462
    %v464 = vrot.slane %v455, %v463
    %v465 = vlaneseq
    %v466 = vshrl.u32 %v465, 7
    %v467 = vsub.s32 2, %v466
    %v468 = vrot.slane %v455, %v467
    %v469 = vlaneseq
    %v470 = vshrl.u32 %v469, 7
    %v471 = vsub.s32 3, %v470
    %v472 = vrot.slane %v455, %v471
    %v473 = vlaneseq
    %v474 = vshrl.u32 %v473, 7
    %v475 = vsub.s32 4, %v474
    %v476 = vrot.slane %v455, %v475
    %v477 = vlaneseq
    %v478 = vshrl.u32 %v477, 7
    %v479 = vsub.s32 5, %v478
    %v480 = vrot.slane %v455, %v479
    %v481 = vlaneseq
    %v482 = vshrl.u32 %v481, 7
    %v483 = vsub.s32 6, %v482
    %v484 = vrot.slane %v455, %v483
    %v485 = vlaneseq
    %v486 = vshrl.u32 %v485, 7
    %v487 = vsub.s32 7, %v486
    %v488 = vrot.slane %v455, %v487
    %v497 = vmul.f32 %v365, %v460
    %v498 = vmul.f32 %v367, %v464
    %v499 = vmul.f32 %v369, %v468
    %v500 = vmul.f32 %v371, %v472
    %v501 = vmul.f32 %v373, %v476
    %v502 = vmul.f32 %v375, %v480
    %v503 = vmul.f32 %v377, %v484
    %v504 = vmul.f32 %v379, %v488
    %v505 = vunpack.c.l.bf16 %v47
    %v506 = vunpack.c.l.bf16 %v48
    %v507 = vunpack.c.l.bf16 %v49
    %v508 = vunpack.c.l.bf16 %v50
    %v509 = vunpack.c.l.bf16 %v51
    %v510 = vunpack.c.l.bf16 %v52
    %v511 = vunpack.c.l.bf16 %v53
    %v512 = vunpack.c.l.bf16 %v54
    %514 = vset.pattern.permute.xlu0 0
    %515 = vperm.xlu0 %514, %v497
    %v516 = vpop.permute.xlu0 %515
    %519 = vset.pattern.permute.xlu0 0
    %520 = vperm.xlu0 %519, %v498
    %v521 = vpop.permute.xlu0 %520
    %524 = vset.pattern.permute.xlu0 0
    %525 = vperm.xlu0 %524, %v499
    %v526 = vpop.permute.xlu0 %525
    %529 = vset.pattern.permute.xlu0 0
    %530 = vperm.xlu0 %529, %v500
    %v531 = vpop.permute.xlu0 %530
    %534 = vset.pattern.permute.xlu0 0
    %535 = vperm.xlu0 %534, %v501
    %v536 = vpop.permute.xlu0 %535
    %539 = vset.pattern.permute.xlu0 0
    %540 = vperm.xlu0 %539, %v502
    %v541 = vpop.permute.xlu0 %540
    %544 = vset.pattern.permute.xlu0 0
    %545 = vperm.xlu0 %544, %v503
    %v546 = vpop.permute.xlu0 %545
    %549 = vset.pattern.permute.xlu0 0
    %550 = vperm.xlu0 %549, %v504
    %v551 = vpop.permute.xlu0 %550
    %v553 = vmul.f32 %v505, %v516
    %v554 = vmul.f32 %v506, %v521
    %v555 = vmul.f32 %v507, %v526
    %v556 = vmul.f32 %v508, %v531
    %v557 = vmul.f32 %v509, %v536
    %v558 = vmul.f32 %v510, %v541
    %v559 = vmul.f32 %v511, %v546
    %v560 = vmul.f32 %v512, %v551
    %v561 = vrot.slane %v553, 4
    %v562 = vadd.f32 %v553, %v561
    %v563 = vrot.slane %v562, 2
    %v564 = vadd.f32 %v562, %v563
    %v565 = vrot.slane %v564, 1
    %v566 = vadd.f32 %v564, %v565
    %v567 = vrot.slane %v554, 4
    %v568 = vadd.f32 %v554, %v567
    %v569 = vrot.slane %v568, 2
    %v570 = vadd.f32 %v568, %v569
    %v571 = vrot.slane %v570, 1
    %v572 = vadd.f32 %v570, %v571
    %v573 = vrot.slane %v555, 4
    %v574 = vadd.f32 %v555, %v573
    %v575 = vrot.slane %v574, 2
    %v576 = vadd.f32 %v574, %v575
    %v577 = vrot.slane %v576, 1
    %v578 = vadd.f32 %v576, %v577
    %v579 = vrot.slane %v556, 4
    %v580 = vadd.f32 %v556, %v579
    %v581 = vrot.slane %v580, 2
    %v582 = vadd.f32 %v580, %v581
    %v583 = vrot.slane %v582, 1
    %v584 = vadd.f32 %v582, %v583
    %v585 = vrot.slane %v557, 4
    %v586 = vadd.f32 %v557, %v585
    %v587 = vrot.slane %v586, 2
    %v588 = vadd.f32 %v586, %v587
    %v589 = vrot.slane %v588, 1
    %v590 = vadd.f32 %v588, %v589
    %v591 = vrot.slane %v558, 4
    %v592 = vadd.f32 %v558, %v591
    %v593 = vrot.slane %v592, 2
    %v594 = vadd.f32 %v592, %v593
    %v595 = vrot.slane %v594, 1
    %v596 = vadd.f32 %v594, %v595
    %v597 = vrot.slane %v559, 4
    %v598 = vadd.f32 %v559, %v597
    %v599 = vrot.slane %v598, 2
    %v600 = vadd.f32 %v598, %v599
    %v601 = vrot.slane %v600, 1
    %v602 = vadd.f32 %v600, %v601
    %v603 = vrot.slane %v560, 4
    %v604 = vadd.f32 %v560, %v603
    %v605 = vrot.slane %v604, 2
    %v606 = vadd.f32 %v604, %v605
    %v607 = vrot.slane %v606, 1
    %v608 = vadd.f32 %v606, %v607
    %v617 = vsel %vm296, %v572, %v566
    %v618 = vsel %vm298, %v578, %v617
    %v619 = vsel %vm300, %v584, %v618
    %v620 = vsel %vm302, %v590, %v619
    %v621 = vsel %vm304, %v596, %v620
    %v622 = vsel %vm306, %v602, %v621
    %v623 = vsel %vm308, %v608, %v622
    %625 = vst [vmem:[#allocation7] sm:$0xff] %v623
    // Predicated region
    $region26: #{tpu_custom_call.1} parent=1 // pred_check
      _
    $region27: #{tpu_custom_call.1} parent=1 // pred_check_branch
      %627 = sbr.rel (0) target = $region29
    $region28: #{tpu_custom_call.1} parent=1 // pred_region
      %s629 = ssub.s32 128, 128
      %630 = vsyncadd [#allocation4], %s629
      %s632 = sshll.u32 [#allocation7], 4
      %s633 = int_to_ptr.vmem [resolvable:$true] %s632
      %635 = dma.vmem_to_hbm [thread:$0]  %s633, 128, %s4, [#allocation4]
    $region29: #{tpu_custom_call.1} parent=1 // pred_fallthru
      _
    // Predicated region
    $region30: #{tpu_custom_call.1} parent=1 // pred_check
      _
    $region31: #{tpu_custom_call.1} parent=1 // pred_check_branch
      %637 = sbr.rel (0) target = $region33
    $region32: #{tpu_custom_call.1} parent=1 // pred_region
      %638 = dma.done [#allocation4], 128
    $region33: #{tpu_custom_call.1} parent=1 // pred_fallthru
      _
    %639 = vsyncpa [#allocation3], 1
    %640 = vsyncpa [#allocation6], 1
    %641 = vsyncpa [#allocation4], 1

// kernel: tpu_custom_call.1
$region0: #{tpu_custom_call.1}
  #allocation0 [shape = 'u32[]', space=smem, size = 0x4, offset = 0x4, fixed_abs, tag = 'smem constant byte address 0x4 - core index']
  #allocation1 [shape = 'u32[144,128]{1,0:T(1,128)}', space=vmem, size = 0x12000, scoped, tag = 'internal scratch']
  %s0 = inlined_call_operand.hbm [shape: bf16[8,8,128], index: 0, kind: input, shape index: {}]
  %s1 = inlined_call_operand.hbm [shape: bf16[128,128], index: 1, kind: input, shape index: {}]
  %s2 = inlined_call_operand.vmem [shape: f32[1,128], index: 2, kind: input, shape index: {}]
  %s3 = inlined_call_operand.vmem [shape: f32[1,128], index: 3, kind: input, shape index: {}]
  %s4 = inlined_call_operand.hbm [shape: f32[8,128], index: 4, kind: output, shape index: {}]
  %s5 = sld [smem:[#allocation0]]
  $region34: #{tpu_custom_call.1} parent=0
    _
  %s7 = ssub.s32 1, %s5
  %s8 = scalar_select 0, %s7, %s5
  $region1: #{tpu_custom_call.1} parent=0
    #allocation2 [shape = 'u8[16384]{0}', space=vmem, size = 0x4000, scoped, tag = 'input window, operand 0, single buffered']
    #allocation3 [shape = 's32[1]{0}', space=sflag, size = 0x4, scoped, tag = 'scoped memory for tpu_custom_call.1']
    #allocation4 [shape = 's32[1]{0}', space=sflag, size = 0x4, scoped, tag = 'scoped memory for tpu_custom_call.1']
    #allocation5 [shape = 'u8[32768]{0}', space=vmem, size = 0x8000, scoped, tag = 'input window, operand 1, single buffered']
    #allocation6 [shape = 's32[1]{0}', space=sflag, size = 0x4, scoped, tag = 'scoped memory for tpu_custom_call.1']
    #allocation7 [shape = 'u8[4096]{0}', space=vmem, size = 0x1000, scoped, tag = 'output window, operand 0, single buffered']
    %9 = vsyncpa [#allocation3], 0
    %10 = vsyncpa [#allocation6], 0
    %11 = vsyncpa [#allocation4], 0
    // Predicated region
    $region2: #{tpu_custom_call.1} parent=1 // pred_check
      _
    $region3: #{tpu_custom_call.1} parent=1 // pred_check_branch
      %13 = sbr.rel (0) target = $region5
    $region4: #{tpu_custom_call.1} parent=1 // pred_region
      %s15 = ssub.s32 512, 512
      %16 = vsyncadd [#allocation3], %s15
      %s17 = sshll.u32 [#allocation2], 4
      %s18 = int_to_ptr.vmem [resolvable:$true] %s17
      %23 = dma.hbm_to_vmem [thread:$0]  %s0, 512, %s18, [#allocation3], 64, 64, 4
    $region5: #{tpu_custom_call.1} parent=1 // pred_fallthru
      _
    // Predicated region
    $region6: #{tpu_custom_call.1} parent=1 // pred_check
      _
    $region7: #{tpu_custom_call.1} parent=1 // pred_check_branch
      %25 = sbr.rel (0) target = $region9
    $region8: #{tpu_custom_call.1} parent=1 // pred_region
      %s27 = ssub.s32 1024, 1024
      %28 = vsyncadd [#allocation6], %s27
      %s29 = sshll.u32 [#allocation5], 4
      %s30 = int_to_ptr.vmem [resolvable:$true] %s29
      %35 = dma.hbm_to_vmem [thread:$0]  %s1, 1024, %s30, [#allocation6], 64, 64, 4
    $region9: #{tpu_custom_call.1} parent=1 // pred_fallthru
      _
    // Predicated region
    $region10: #{tpu_custom_call.1} parent=1 // pred_check
      _
    $region11: #{tpu_custom_call.1} parent=1 // pred_check_branch
      %37 = sbr.rel (0) target = $region13
    $region12: #{tpu_custom_call.1} parent=1 // pred_region
      _
    $region13: #{tpu_custom_call.1} parent=1 // pred_fallthru
      _
    // Predicated region
    $region14: #{tpu_custom_call.1} parent=1 // pred_check
      _
    $region15: #{tpu_custom_call.1} parent=1 // pred_check_branch
      %39 = sbr.rel (0) target = $region17
    $region16: #{tpu_custom_call.1} parent=1 // pred_region
      _
    $region17: #{tpu_custom_call.1} parent=1 // pred_fallthru
      _
    // Predicated region
    $region18: #{tpu_custom_call.1} parent=1 // pred_check
      _
    $region19: #{tpu_custom_call.1} parent=1 // pred_check_branch
      %41 = sbr.rel (0) target = $region21
    $region20: #{tpu_custom_call.1} parent=1 // pred_region
      %42 = dma.done [#allocation3], 512
    $region21: #{tpu_custom_call.1} parent=1 // pred_fallthru
      _
    // Predicated region
    $region22: #{tpu_custom_call.1} parent=1 // pred_check
      _
    $region23: #{tpu_custom_call.1} parent=1 // pred_check_branch
      %44 = sbr.rel (0) target = $region25
    $region24: #{tpu_custom_call.1} parent=1 // pred_region
      %45 = dma.done [#allocation6], 1024
    $region25: #{tpu_custom_call.1} parent=1 // pred_fallthru
      _
    %v47 = vld [vmem:[#allocation2] sm:$0xf]
    %v48 = vld [vmem:[#allocation2 + $0x4] sm:$0xf]
    %v49 = vld [vmem:[#allocation2 + $0x8] sm:$0xf]
    %v50 = vld [vmem:[#allocation2 + $0xc] sm:$0xf]
    %v51 = vld [vmem:[#allocation2 + $0x10] sm:$0xf]
    %v52 = vld [vmem:[#allocation2 + $0x14] sm:$0xf]
    %v53 = vld [vmem:[#allocation2 + $0x18] sm:$0xf]
    %v54 = vld [vmem:[#allocation2 + $0x1c] sm:$0xf]
    %v55 = vld [vmem:[#allocation5] sm:$0xf]
    %v56 = vld [vmem:[#allocation5 + $0x4] sm:$0xf]
    %v57 = vld [vmem:[#allocation5 + $0x8] sm:$0xf]
    %v58 = vld [vmem:[#allocation5 + $0xc] sm:$0xf]
    %v59 = vld [vmem:[#allocation5 + $0x10] sm:$0xf]
    %v60 = vld [vmem:[#allocation5 + $0x14] sm:$0xf]
    %v61 = vld [vmem:[#allocation5 + $0x18] sm:$0xf]
    %v62 = vld [vmem:[#allocation5 + $0x1c] sm:$0xf]
    %v63 = vld [vmem:[#allocation5 + $0x20] sm:$0xf]
    %v64 = vld [vmem:[#allocation5 + $0x24] sm:$0xf]
    %v65 = vld [vmem:[#allocation5 + $0x28] sm:$0xf]
    %v66 = vld [vmem:[#allocation5 + $0x2c] sm:$0xf]
    %v67 = vld [vmem:[#allocation5 + $0x30] sm:$0xf]
    %v68 = vld [vmem:[#allocation5 + $0x34] sm:$0xf]
    %v69 = vld [vmem:[#allocation5 + $0x38] sm:$0xf]
    %v70 = vld [vmem:[#allocation5 + $0x3c] sm:$0xf]
    %v71 = vld [vmem:[%s2] sm:$0x1]
    %v73 = vlaneseq
    %v74 = vshrl.u32 %v73, 7
    %v75 = vsub.s32 0, %v74
    %v76 = vrot.slane %v71, %v75
    %v86 = vunpack.c.l.b16 %v47
    %v87 = vunpack.c.l.b16 %v48
    %v88 = vunpack.c.l.b16 %v49
    %v89 = vunpack.c.l.b16 %v50
    %v90 = vunpack.c.l.b16 %v51
    %v91 = vunpack.c.l.b16 %v52
    %v92 = vunpack.c.l.b16 %v53
    %v93 = vunpack.c.l.b16 %v54
    %v94 = vpack.c.b16 %v87, %v86
    %v95 = vpack.c.b16 %v89, %v88
    %v96 = vpack.c.b16 %v91, %v90
    %v97 = vpack.c.b16 %v93, %v92
    %v118 = vunpack.c.l.b16 %v55
    %v119 = vunpack.c.l.b16 %v56
    %v120 = vunpack.c.l.b16 %v57
    %v121 = vunpack.c.l.b16 %v58
    %v122 = vunpack.c.l.b16 %v59
    %v123 = vunpack.c.l.b16 %v60
    %v124 = vunpack.c.l.b16 %v61
    %v125 = vunpack.c.l.b16 %v62
    %v126 = vunpack.c.l.b16 %v63
    %v127 = vunpack.c.l.b16 %v64
    %v128 = vunpack.c.l.b16 %v65
    %v129 = vunpack.c.l.b16 %v66
    %v130 = vunpack.c.l.b16 %v67
    %v131 = vunpack.c.l.b16 %v68
    %v132 = vunpack.c.l.b16 %v69
    %v133 = vunpack.c.l.b16 %v70
    %v134 = vpack.c.b16 %v119, %v118
    %v135 = vpack.c.b16 %v121, %v120
    %v136 = vpack.c.b16 %v123, %v122
    %v137 = vpack.c.b16 %v125, %v124
    %v138 = vpack.c.b16 %v127, %v126
    %v139 = vpack.c.b16 %v129, %v128
    %v140 = vpack.c.b16 %v131, %v130
    %v141 = vpack.c.b16 %v133, %v132
    %150 = vmatprep.subr.bf16.mxu0 0
    %151 = vmatpush1.bf16.msra.mxu0 %v141
    %152 = vmatprep.subr.bf16.mxu0 0
    %153 = vmatpush1.bf16.msra.mxu0 %v140
    %154 = vmatprep.subr.bf16.mxu0 0
    %155 = vmatpush1.bf16.msra.mxu0 %v139
    %156 = vmatprep.subr.bf16.mxu0 0
    %157 = vmatpush1.bf16.msra.mxu0 %v138
    %158 = vmatprep.subr.bf16.mxu0 0
    %159 = vmatpush1.bf16.msra.mxu0 %v137
    %160 = vmatprep.subr.bf16.mxu0 0
    %161 = vmatpush1.bf16.msra.mxu0 %v136
    %162 = vmatprep.subr.bf16.mxu0 0
    %163 = vmatpush1.bf16.msra.mxu0 %v135
    %164 = vmatprep.subr.bf16.mxu0 0
    %165 = vmatpush1.bf16.msra.mxu0 %v134
    %166 = vmatprep.subr.bf16.mxu0 0
    %167 = vmatpush2.bf16.msra.mxu0 0
    %168 = vmatprep.subr.bf16.mxu0 0
    %169 = vmatpush2.bf16.msra.mxu0 0
    %170 = vmatprep.subr.bf16.mxu0 0
    %171 = vmatpush2.bf16.msra.mxu0 0
    %172 = vmatprep.subr.bf16.mxu0 0
    %173 = vmatpush2.bf16.msra.mxu0 0
    %174 = vmatprep.subr.bf16.mxu0 0
    %175 = vmatpush2.bf16.msra.mxu0 0
    %176 = vmatprep.subr.bf16.mxu0 0
    %177 = vmatpush2.bf16.msra.mxu0 0
    %178 = vmatprep.subr.bf16.mxu0 0
    %179 = vmatpush2.bf16.msra.mxu0 0
    %180 = vmatprep.subr.bf16.mxu0 0
    %181 = vmatpush2.bf16.msra.mxu0 0
    %182 = vmatprep.mubr.bf16.mxu0 0
    %183 = vmatmul.mubr.bf16.gmra.mxu0 %v94
    %v184 = vpop.f32.mrf.mxu0
    %v185 = vadd.f32 %v76, %v184
    %v186 = vpop.f32.mrf.mxu0
    %v187 = vpop.f32.mrf.mxu0
    %v188 = vadd.f32 %v76, %v187
    %v189 = vpop.f32.mrf.mxu0
    %190 = vmatprep.mubr.bf16.mxu0 0
    %191 = vmatmul.mubr.bf16.gmra.mxu0 %v95
    %v192 = vpop.f32.mrf.mxu0
    %v193 = vadd.f32 %v76, %v192
    %v194 = vpop.f32.mrf.mxu0
    %v195 = vpop.f32.mrf.mxu0
    %v196 = vadd.f32 %v76, %v195
    %v197 = vpop.f32.mrf.mxu0
    %198 = vmatprep.mubr.bf16.mxu0 0
    %199 = vmatmul.mubr.bf16.gmra.mxu0 %v96
    %v200 = vpop.f32.mrf.mxu0
    %v201 = vadd.f32 %v76, %v200
    %v202 = vpop.f32.mrf.mxu0
    %v203 = vpop.f32.mrf.mxu0
    %v204 = vadd.f32 %v76, %v203
    %v205 = vpop.f32.mrf.mxu0
    %206 = vmatprep.mubr.bf16.mxu0 0
    %207 = vmatmul.mubr.bf16.gmra.mxu0 %v97
    %v208 = vpop.f32.mrf.mxu0
    %v209 = vadd.f32 %v76, %v208
    %v210 = vpop.f32.mrf.mxu0
    %v211 = vpop.f32.mrf.mxu0
    %v212 = vadd.f32 %v76, %v211
    %v213 = vpop.f32.mrf.mxu0
    %214 = vdwg.mxu0
    %v215 = vtanh.pop %v185
    %v216 = vtanh.pop %v188
    %v217 = vtanh.pop %v193
    %v218 = vtanh.pop %v196
    %v219 = vtanh.pop %v201
    %v220 = vtanh.pop %v204
    %v221 = vtanh.pop %v209
    %v222 = vtanh.pop %v212
    %v223 = vld [vmem:[%s3] sm:$0x1]
    %v225 = vlaneseq
    %v226 = vshrl.u32 %v225, 7
    %v227 = vsub.s32 0, %v226
    %v228 = vrot.slane %v223, %v227
    %v230 = vmul.f32 %v215, %v228
    %v231 = vmul.f32 %v216, %v228
    %v232 = vmul.f32 %v217, %v228
    %v233 = vmul.f32 %v218, %v228
    %v234 = vmul.f32 %v219, %v228
    %v235 = vmul.f32 %v220, %v228
    %v236 = vmul.f32 %v221, %v228
    %v237 = vmul.f32 %v222, %v228
    %238 = vadd.xlane.f32.xlu0 %v230
    %v239 = vpop.xlane.xlu0 %238
    %240 = vadd.xlane.f32.xlu0 %v231
    %v241 = vpop.xlane.xlu0 %240
    %242 = vadd.xlane.f32.xlu0 %v232
    %v243 = vpop.xlane.xlu0 %242
    %244 = vadd.xlane.f32.xlu0 %v233
    %v245 = vpop.xlane.xlu0 %244
    %246 = vadd.xlane.f32.xlu0 %v234
    %v247 = vpop.xlane.xlu0 %246
    %248 = vadd.xlane.f32.xlu0 %v235
    %v249 = vpop.xlane.xlu0 %248
    %250 = vadd.xlane.f32.xlu0 %v236
    %v251 = vpop.xlane.xlu0 %250
    %252 = vadd.xlane.f32.xlu0 %v237
    %v253 = vpop.xlane.xlu0 %252
    %v262 = vlaneseq
    %v263 = vand.u32 %v262, 127
    %v264 = vlaneseq
    %v265 = vshrl.u32 %v264, 7
    %v266 = vsub.s32 %v263, %v265
    %v267 = vrot.slane %v239, %v266
    %v268 = vlaneseq
    %v269 = vshrl.u32 %v268, 7
    %v270 = vsub.s32 %v263, %v269
    %v271 = vrot.slane %v241, %v270
    %v272 = vlaneseq
    %v273 = vshrl.u32 %v272, 7
    %v274 = vsub.s32 %v263, %v273
    %v275 = vrot.slane %v243, %v274
    %v276 = vlaneseq
    %v277 = vshrl.u32 %v276, 7
    %v278 = vsub.s32 %v263, %v277
    %v279 = vrot.slane %v245, %v278
    %v280 = vlaneseq
    %v281 = vshrl.u32 %v280, 7
    %v282 = vsub.s32 %v263, %v281
    %v283 = vrot.slane %v247, %v282
    %v284 = vlaneseq
    %v285 = vshrl.u32 %v284, 7
    %v286 = vsub.s32 %v263, %v285
    %v287 = vrot.slane %v249, %v286
    %v288 = vlaneseq
    %v289 = vshrl.u32 %v288, 7
    %v290 = vsub.s32 %v263, %v289
    %v291 = vrot.slane %v251, %v290
    %v292 = vlaneseq
    %v293 = vshrl.u32 %v292, 7
    %v294 = vsub.s32 %v263, %v293
    %v295 = vrot.slane %v253, %v294
    %vm296 = vcmask 1041409
    %v297 = vsel %vm296, %v271, %v267
    %vm298 = vcmask 1042434
    %v299 = vsel %vm298, %v275, %v297
    %vm300 = vcmask 1043459
    %v301 = vsel %vm300, %v279, %v299
    %vm302 = vcmask 1044484
    %v303 = vsel %vm302, %v283, %v301
    %vm304 = vcmask 1045509
    %v305 = vsel %vm304, %v287, %v303
    %vm306 = vcmask 1046534
    %v307 = vsel %vm306, %v291, %v305
    %vm308 = vcmask 1047559
    %v309 = vsel %vm308, %v295, %v307
    %vm311 = vcmask 64512
    %v312 = vsel %vm311, %v309, -inf
    %313 = vmax.xlane.f32.xlu0 %v312
    %v314 = vpop.xlane.xlu0 %313
    %v316 = vlaneseq
    %v317 = vshrl.u32 %v316, 7
    %v318 = vsub.s32 0, %v317
    %v319 = vrot.slane %v314, %v318
    %v320 = vlaneseq
    %v321 = vshrl.u32 %v320, 7
    %v322 = vsub.s32 1, %v321
    %v323 = vrot.slane %v314, %v322
    %v324 = vlaneseq
    %v325 = vshrl.u32 %v324, 7
    %v326 = vsub.s32 2, %v325
    %v327 = vrot.slane %v314, %v326
    %v328 = vlaneseq
    %v329 = vshrl.u32 %v328, 7
    %v330 = vsub.s32 3, %v329
    %v331 = vrot.slane %v314, %v330
    %v332 = vlaneseq
    %v333 = vshrl.u32 %v332, 7
    %v334 = vsub.s32 4, %v333
    %v335 = vrot.slane %v314, %v334
    %v336 = vlaneseq
    %v337 = vshrl.u32 %v336, 7
    %v338 = vsub.s32 5, %v337
    %v339 = vrot.slane %v314, %v338
    %v340 = vlaneseq
    %v341 = vshrl.u32 %v340, 7
    %v342 = vsub.s32 6, %v341
    %v343 = vrot.slane %v314, %v342
    %v344 = vlaneseq
    %v345 = vshrl.u32 %v344, 7
    %v346 = vsub.s32 7, %v345
    %v347 = vrot.slane %v314, %v346
    %v356 = vsub.f32 %v239, %v319
    %v357 = vsub.f32 %v241, %v323
    %v358 = vsub.f32 %v243, %v327
    %v359 = vsub.f32 %v245, %v331
    %v360 = vsub.f32 %v247, %v335
    %v361 = vsub.f32 %v249, %v339
    %v362 = vsub.f32 %v251, %v343
    %v363 = vsub.f32 %v253, %v347
    %v364 = vmul.f32 %v356, 1.442695
    %v365 = vpow.pop %v364
    %v366 = vmul.f32 %v357, 1.442695
    %v367 = vpow.pop %v366
    %v368 = vmul.f32 %v358, 1.442695
    %v369 = vpow.pop %v368
    %v370 = vmul.f32 %v359, 1.442695
    %v371 = vpow.pop %v370
    %v372 = vmul.f32 %v360, 1.442695
    %v373 = vpow.pop %v372
    %v374 = vmul.f32 %v361, 1.442695
    %v375 = vpow.pop %v374
    %v376 = vmul.f32 %v362, 1.442695
    %v377 = vpow.pop %v376
    %v378 = vmul.f32 %v363, 1.442695
    %v379 = vpow.pop %v378
    %388 = vset.pattern.permute.xlu0 0
    %389 = vperm.xlu0 %388, %v365
    %v390 = vpop.permute.xlu0 %389
    %391 = vset.pattern.permute.xlu0 0
    %392 = vperm.xlu0 %391, %v367
    %v393 = vpop.permute.xlu0 %392
    %394 = vset.pattern.permute.xlu0 0
    %395 = vperm.xlu0 %394, %v369
    %v396 = vpop.permute.xlu0 %395
    %397 = vset.pattern.permute.xlu0 0
    %398 = vperm.xlu0 %397, %v371
    %v399 = vpop.permute.xlu0 %398
    %400 = vset.pattern.permute.xlu0 0
    %401 = vperm.xlu0 %400, %v373
    %v402 = vpop.permute.xlu0 %401
    %403 = vset.pattern.permute.xlu0 0
    %404 = vperm.xlu0 %403, %v375
    %v405 = vpop.permute.xlu0 %404
    %406 = vset.pattern.permute.xlu0 0
    %407 = vperm.xlu0 %406, %v377
    %v408 = vpop.permute.xlu0 %407
    %409 = vset.pattern.permute.xlu0 0
    %410 = vperm.xlu0 %409, %v379
    %v411 = vpop.permute.xlu0 %410
    %v412 = vlaneseq
    %v413 = vshrl.u32 %v412, 7
    %v414 = vsub.s32 %v263, %v413
    %v415 = vrot.slane %v390, %v414
    %v416 = vlaneseq
    %v417 = vshrl.u32 %v416, 7
    %v418 = vsub.s32 %v263, %v417
    %v419 = vrot.slane %v393, %v418
    %v420 = vlaneseq
    %v421 = vshrl.u32 %v420, 7
    %v422 = vsub.s32 %v263, %v421
    %v423 = vrot.slane %v396, %v422
    %v424 = vlaneseq
    %v425 = vshrl.u32 %v424, 7
    %v426 = vsub.s32 %v263, %v425
    %v427 = vrot.slane %v399, %v426
    %v428 = vlaneseq
    %v429 = vshrl.u32 %v428, 7
    %v430 = vsub.s32 %v263, %v429
    %v431 = vrot.slane %v402, %v430
    %v432 = vlaneseq
    %v433 = vshrl.u32 %v432, 7
    %v434 = vsub.s32 %v263, %v433
    %v435 = vrot.slane %v405, %v434
    %v436 = vlaneseq
    %v437 = vshrl.u32 %v436, 7
    %v438 = vsub.s32 %v263, %v437
    %v439 = vrot.slane %v408, %v438
    %v440 = vlaneseq
    %v441 = vshrl.u32 %v440, 7
    %v442 = vsub.s32 %v263, %v441
    %v443 = vrot.slane %v411, %v442
    %v444 = vsel %vm296, %v419, %v415
    %v445 = vsel %vm298, %v423, %v444
    %v446 = vsel %vm300, %v427, %v445
    %v447 = vsel %vm302, %v431, %v446
    %v448 = vsel %vm304, %v435, %v447
    %v449 = vsel %vm306, %v439, %v448
    %v450 = vsel %vm308, %v443, %v449
    %v452 = vsel %vm311, %v450, 0.0
    %453 = vadd.xlane.f32.xlu0 %v452
    %v454 = vpop.xlane.xlu0 %453
    %v455 = vrcp.pop %v454
    %v457 = vlaneseq
    %v458 = vshrl.u32 %v457, 7
    %v459 = vsub.s32 0, %v458
    %v460 = vrot.slane %v455, %v459
    %v461 = vlaneseq
    %v462 = vshrl.u32 %v461, 7
    %v463 = vsub.s32 1, %v462
    %v464 = vrot.slane %v455, %v463
    %v465 = vlaneseq
    %v466 = vshrl.u32 %v465, 7
    %v467 = vsub.s32 2, %v466
    %v468 = vrot.slane %v455, %v467
    %v469 = vlaneseq
    %v470 = vshrl.u32 %v469, 7
    %v471 = vsub.s32 3, %v470
    %v472 = vrot.slane %v455, %v471
    %v473 = vlaneseq
    %v474 = vshrl.u32 %v473, 7
    %v475 = vsub.s32 4, %v474
    %v476 = vrot.slane %v455, %v475
    %v477 = vlaneseq
    %v478 = vshrl.u32 %v477, 7
    %v479 = vsub.s32 5, %v478
    %v480 = vrot.slane %v455, %v479
    %v481 = vlaneseq
    %v482 = vshrl.u32 %v481, 7
    %v483 = vsub.s32 6, %v482
    %v484 = vrot.slane %v455, %v483
    %v485 = vlaneseq
    %v486 = vshrl.u32 %v485, 7
    %v487 = vsub.s32 7, %v486
    %v488 = vrot.slane %v455, %v487
    %v497 = vmul.f32 %v365, %v460
    %v498 = vmul.f32 %v367, %v464
    %v499 = vmul.f32 %v369, %v468
    %v500 = vmul.f32 %v371, %v472
    %v501 = vmul.f32 %v373, %v476
    %v502 = vmul.f32 %v375, %v480
    %v503 = vmul.f32 %v377, %v484
    %v504 = vmul.f32 %v379, %v488
    %v505 = vunpack.c.l.bf16 %v47
    %v506 = vunpack.c.l.bf16 %v48
    %v507 = vunpack.c.l.bf16 %v49
    %v508 = vunpack.c.l.bf16 %v50
    %v509 = vunpack.c.l.bf16 %v51
    %v510 = vunpack.c.l.bf16 %v52
    %v511 = vunpack.c.l.bf16 %v53
    %v512 = vunpack.c.l.bf16 %v54
    %514 = vset.pattern.permute.xlu0 0
    %515 = vperm.xlu0 %514, %v497
    %v516 = vpop.permute.xlu0 %515
    %519 = vset.pattern.permute.xlu0 0
    %520 = vperm.xlu0 %519, %v498
    %v521 = vpop.permute.xlu0 %520
    %524 = vset.pattern.permute.xlu0 0
    %525 = vperm.xlu0 %524, %v499
    %v526 = vpop.permute.xlu0 %525
    %529 = vset.pattern.permute.xlu0 0
    %530 = vperm.xlu0 %529, %v500
    %v531 = vpop.permute.xlu0 %530
    %534 = vset.pattern.permute.xlu0 0
    %535 = vperm.xlu0 %534, %v501
    %v536 = vpop.permute.xlu0 %535
    %539 = vset.pattern.permute.xlu0 0
    %540 = vperm.xlu0 %539, %v502
    %v541 = vpop.permute.xlu0 %540
    %544 = vset.pattern.permute.xlu0 0
    %545 = vperm.xlu0 %544, %v503
    %v546 = vpop.permute.xlu0 %545
    %549 = vset.pattern.permute.xlu0 0
    %550 = vperm.xlu0 %549, %v504
    %v551 = vpop.permute.xlu0 %550
    %v553 = vmul.f32 %v505, %v516
    %v554 = vmul.f32 %v506, %v521
    %v555 = vmul.f32 %v507, %v526
    %v556 = vmul.f32 %v508, %v531
    %v557 = vmul.f32 %v509, %v536
    %v558 = vmul.f32 %v510, %v541
    %v559 = vmul.f32 %v511, %v546
    %v560 = vmul.f32 %v512, %v551
    %v561 = vrot.slane %v553, 4
    %v562 = vadd.f32 %v553, %v561
    %v563 = vrot.slane %v562, 2
    %v564 = vadd.f32 %v562, %v563
    %v565 = vrot.slane %v564, 1
    %v566 = vadd.f32 %v564, %v565
    %v567 = vrot.slane %v554, 4
    %v568 = vadd.f32 %v554, %v567
    %v569 = vrot.slane %v568, 2
    %v570 = vadd.f32 %v568, %v569
    %v571 = vrot.slane %v570, 1
    %v572 = vadd.f32 %v570, %v571
    %v573 = vrot.slane %v555, 4
    %v574 = vadd.f32 %v555, %v573
    %v575 = vrot.slane %v574, 2
    %v576 = vadd.f32 %v574, %v575
    %v577 = vrot.slane %v576, 1
    %v578 = vadd.f32 %v576, %v577
    %v579 = vrot.slane %v556, 4
    %v580 = vadd.f32 %v556, %v579
    %v581 = vrot.slane %v580, 2
    %v582 = vadd.f32 %v580, %v581
    %v583 = vrot.slane %v582, 1
    %v584 = vadd.f32 %v582, %v583
    %v585 = vrot.slane %v557, 4
    %v586 = vadd.f32 %v557, %v585
    %v587 = vrot.slane %v586, 2
    %v588 = vadd.f32 %v586, %v587
    %v589 = vrot.slane %v588, 1
    %v590 = vadd.f32 %v588, %v589
    %v591 = vrot.slane %v558, 4
    %v592 = vadd.f32 %v558, %v591
    %v593 = vrot.slane %v592, 2
    %v594 = vadd.f32 %v592, %v593
    %v595 = vrot.slane %v594, 1
    %v596 = vadd.f32 %v594, %v595
    %v597 = vrot.slane %v559, 4
    %v598 = vadd.f32 %v559, %v597
    %v599 = vrot.slane %v598, 2
    %v600 = vadd.f32 %v598, %v599
    %v601 = vrot.slane %v600, 1
    %v602 = vadd.f32 %v600, %v601
    %v603 = vrot.slane %v560, 4
    %v604 = vadd.f32 %v560, %v603
    %v605 = vrot.slane %v604, 2
    %v606 = vadd.f32 %v604, %v605
    %v607 = vrot.slane %v606, 1
    %v608 = vadd.f32 %v606, %v607
    %v617 = vsel %vm296, %v572, %v566
    %v618 = vsel %vm298, %v578, %v617
    %v619 = vsel %vm300, %v584, %v618
    %v620 = vsel %vm302, %v590, %v619
    %v621 = vsel %vm304, %v596, %v620
    %v622 = vsel %vm306, %v602, %v621
    %v623 = vsel %vm308, %v608, %v622
    %625 = vst [vmem:[#allocation7] sm:$0xff] %v623
    // Predicated region
    $region26: #{tpu_custom_call.1} parent=1 // pred_check
      _
    $region27: #{tpu_custom_call.1} parent=1 // pred_check_branch
      %627 = sbr.rel (0) target = $region29
    $region28: #{tpu_custom_call.1} parent=1 // pred_region
      %s629 = ssub.s32 128, 128
      %630 = vsyncadd [#allocation4], %s629
      %s632 = sshll.u32 [#allocation7], 4
      %s633 = int_to_ptr.vmem [resolvable:$true] %s632
      %635 = dma.vmem_to_hbm [thread:$0]  %s633, 128, %s4, [#allocation4]
    $region29: #{tpu_custom_call.1} parent=1 // pred_fallthru
      _
    // Predicated region
    $region30: #{tpu_custom_call.1} parent=1 // pred_check
      _
    $region31: #{tpu_custom_call.1} parent=1 // pred_check_branch
      %637 = sbr.rel (0) target = $region33
    $region32: #{tpu_custom_call.1} parent=1 // pred_region
      %638 = dma.done [#allocation4], 128
    $region33: #{tpu_custom_call.1} parent=1 // pred_fallthru
      _
    %639 = vsyncpa [#allocation3], 1
    %640 = vsyncpa [#allocation6], 1
    %641 = vsyncpa [#allocation4], 1

</llo_original>
